<compile_context>
chip_gen: v7x
topology: tpu7x:2x2x1
jax: 0.10.0
libtpu: 0.0.40
codegen_flags: <defaults>
</compile_context>

<pallas_src>
import functools

import jax
import jax.numpy as jnp
import numpy as np
from jax.experimental import pallas as pl
from jax.experimental.pallas import tpu as pltpu

_LANE = 128
_SMEM_MAX_ELEMS = 128  # beyond this, route to the lane-dense VMEM kernel


# -----------------------------------------------------------------------------
# Small-N path: 1-D int32 concat entirely in SMEM (scalar pipe, no grid, no
# VMEM/MXU/DMA involvement on any TPU generation).
# -----------------------------------------------------------------------------
def _concat_kernel_smem(a_ref, b_ref, o_ref):
    # Shapes are static at trace time; these Python loops unroll into a handful
    # of scalar sld/sst pairs.  This path is gated to na + nb <= _SMEM_MAX_ELEMS
    # so the unroll stays tiny (N = 3 for this module); larger concats take the
    # VMEM lane-dense path below, which keeps code size constant as N grows.
    na = a_ref.shape[0]
    nb = b_ref.shape[0]
    for i in range(na):
        o_ref[i] = a_ref[i]
    for j in range(nb):
        o_ref[na + j] = b_ref[j]


@functools.lru_cache(maxsize=None)
def _build_concat_smem(na: int, nb: int):
    call = pl.pallas_call(
        _concat_kernel_smem,
        out_shape=jax.ShapeDtypeStruct((na + nb,), jnp.int32),
        in_specs=[
            pl.BlockSpec(memory_space=pltpu.SMEM),
            pl.BlockSpec(memory_space=pltpu.SMEM),
        ],
        out_specs=pl.BlockSpec(memory_space=pltpu.SMEM),
    )
    return jax.jit(lambda a, b: call(a, b))


# -----------------------------------------------------------------------------
# Large-N fallback: lane-dense VMEM merge (review item: vst slot, not scalar pipe).
# -----------------------------------------------------------------------------
def _merge_kernel_vmem(a_ref, b_ref, o_ref):
    # a_ref/b_ref/o_ref: (1, NPAD) int32 tiles resident in VMEM (full-array
    # blocks, no grid).  `a` occupies lanes [0, na) and `b` lanes [na, na+nb)
    # with zeros elsewhere (positioned once by a cheap fused XLA pad on the host
    # side of the same jit), so a single full-tile VPU add is an exact
    # concatenation and the result leaves through unmasked vector stores.
    o_ref[...] = a_ref[...] + b_ref[...]


@functools.lru_cache(maxsize=None)
def _build_concat_vmem(na: int, nb: int):
    n = na + nb
    npad = ((n + _LANE - 1) // _LANE) * _LANE

    call = pl.pallas_call(
        _merge_kernel_vmem,
        out_shape=jax.ShapeDtypeStruct((1, npad), jnp.int32),
        # No in/out specs: whole arrays land in VMEM by default (lane-dense).
    )

    def fn(a, b):
        a2d = jnp.zeros((1, npad), jnp.int32).at[0, :na].set(a)
        b2d = jnp.zeros((1, npad), jnp.int32).at[0, na:na + nb].set(b)
        return call(a2d, b2d)[0, :n]

    return jax.jit(fn)


def get_concat_fn(na: int, nb: int):
    """Return the cached, jitted concat callable for static lengths (na, nb).

    Tight-loop callers (esp. on v5e where dispatch dominates) should call this
    once and reuse the returned callable, instead of going through
    tuple_add_device per iteration.
    """
    if na + nb <= _SMEM_MAX_ELEMS:
        return _build_concat_smem(na, nb)
    return _build_concat_vmem(na, nb)


# Hoisted constant corresponding to the literal (256,) in the original module.
_EXTRA_TUPLE = (256,)
_EXTRA_CONST = jnp.asarray(_EXTRA_TUPLE, dtype=jnp.int32)


def tuple_add_device(a, b=_EXTRA_CONST):
    """Device-side concatenation of two small int32 vectors via a Pallas kernel."""
    a = a if isinstance(a, jax.Array) else jnp.asarray(a, jnp.int32)
    b = b if isinstance(b, jax.Array) else jnp.asarray(b, jnp.int32)
    fn = get_concat_fn(int(a.shape[0]), int(b.shape[0]))
    return fn(a, b)


class M:
    """JAX counterpart of the PyTorch module M (tuple concatenation)."""

    def forward(self, x479):
        # x480 = operator.add(x479, (256,)) — pure Python tuple concat.  This is
        # the production path on every TPU generation: 12 bytes of shape
        # metadata never justify an H2D DMA + kernel launch + D2H sync.
        return tuple(x479) + _EXTRA_TUPLE

    def forward_pallas(self, x479):
        """Optional device-side path, kept to verify the Pallas kernels.

        Review fixes: no per-call jnp.asarray when a device array is already
        provided (tuple_add_device passes jax.Arrays through), and no redundant
        jax.block_until_ready — .tolist() is already a synchronous D2H copy.
        """
        out = tuple_add_device(x479)
        return tuple(out.tolist())


if __name__ == "__main__":
    # Deterministic inputs.  The module itself only needs the tuple (1, 384);
    # the PRNG key is used for the synthetic large-N check of the VMEM fallback.
    key = jax.random.PRNGKey(0)
    x479 = (1, 384)

    m = M()

    # Production (host) path — matches the original PyTorch module exactly.
    x480 = m.forward(x479)
    assert x480 == (1, 384, 256), f"unexpected host result: {x480}"

    # Pallas SMEM path with the actual module shapes (N = 3): run once on TPU,
    # block on the result, verify.
    dev_out = tuple_add_device(jnp.asarray(x479, jnp.int32))
    dev_out = jax.block_until_ready(dev_out)
    assert tuple(dev_out.tolist()) == x480, f"unexpected SMEM kernel result: {dev_out}"
    assert m.forward_pallas(x479) == x480

    # Gated VMEM lane-dense fallback (large-N path): run once, block, verify
    # against a NumPy reference concat.
    na, nb = 200, 136  # na + nb = 336 > _SMEM_MAX_ELEMS -> VMEM path (NPAD = 384)
    ka, kb = jax.random.split(key)
    big_a = jax.random.randint(ka, (na,), 0, 1000, dtype=jnp.int32)
    big_b = jax.random.randint(kb, (nb,), 0, 1000, dtype=jnp.int32)
    big_out = jax.block_until_ready(tuple_add_device(big_a, big_b))
    np.testing.assert_array_equal(
        np.asarray(big_out),
        np.concatenate([np.asarray(big_a), np.asarray(big_b)]),
    )

    print("KERNEL_OK")
</pallas_src>

<mosaic_0001>
module attributes {stable_mosaic.version = 11 : i64} {
  func.func @_concat_kernel_smem(%arg0: memref<2xi32, #tpu.memory_space<smem>>, %arg1: memref<1xi32, #tpu.memory_space<smem>>, %arg2: memref<3xi32, #tpu.memory_space<smem>>) attributes {dimension_semantics = [], scalar_prefetch = 0 : i64, scratch_operands = 0 : i64, tpu.core_type = #tpu.core_type<tc>} {
    %c0 = arith.constant 0 : index
    %0 = memref.load %arg0[%c0] : memref<2xi32, #tpu.memory_space<smem>>
    %c0_0 = arith.constant 0 : index
    %1 = memref.load %arg2[%c0_0] : memref<3xi32, #tpu.memory_space<smem>>
    memref.store %0, %arg2[%c0_0] : memref<3xi32, #tpu.memory_space<smem>>
    %c1 = arith.constant 1 : index
    %2 = memref.load %arg0[%c1] : memref<2xi32, #tpu.memory_space<smem>>
    %c1_1 = arith.constant 1 : index
    %3 = memref.load %arg2[%c1_1] : memref<3xi32, #tpu.memory_space<smem>>
    memref.store %2, %arg2[%c1_1] : memref<3xi32, #tpu.memory_space<smem>>
    %c0_2 = arith.constant 0 : index
    %4 = memref.load %arg1[%c0_2] : memref<1xi32, #tpu.memory_space<smem>>
    %c2 = arith.constant 2 : index
    %5 = memref.load %arg2[%c2] : memref<3xi32, #tpu.memory_space<smem>>
    memref.store %4, %arg2[%c2] : memref<3xi32, #tpu.memory_space<smem>>
    return
  }
}

</mosaic_0001>

<llo_original>
// kernel: _lambda_.1
$region0: #{_lambda_.1}
  #allocation0 [shape = 'u32[]', space=smem, size = 0x4, offset = 0x4, fixed_abs, tag = 'smem constant byte address 0x4 - core index']
  #allocation1 [shape = 'u32[144,128]{1,0:T(1,128)}', space=vmem, size = 0x12000, scoped, tag = 'internal scratch']
  #allocation2 [shape = 's32[1]{0:T(128)S(6)}', space=smem, size = 0x200, scoped, tag = 'scoped memory for _lambda_.1']
  %s0 = inlined_call_operand.vmem [shape: s32[2], index: 0, kind: input, shape index: {}]
  %s1 = inlined_call_operand.<no memory space> [shape: s32[1], index: 1, kind: input, shape index: {}]
  %s2 = inlined_call_operand.hbm [shape: s32[3], index: 2, kind: output, shape index: {}]
  %s3 = sld [smem:[#allocation0]]
  $region22: #{_lambda_.1} parent=0
    _
  %s5 = ssub.s32 1, %s3
  %s6 = scalar_select 0, %s5, %s3
  %7 = sst [smem:[#allocation2]] %s1
  $region1: #{_lambda_.1} parent=0
    #allocation3 [shape = 'u8[512]{0}', space=smem, size = 0x200, scoped, tag = 'input window, operand 0, single buffered']
    #allocation4 [shape = 's32[1]{0}', space=sflag, size = 0x4, scoped, tag = 'scoped memory for _lambda_.1']
    #allocation5 [shape = 's32[1]{0}', space=sflag, size = 0x4, scoped, tag = 'scoped memory for _lambda_.1']
    #allocation6 [shape = 'u8[512]{0}', space=smem, size = 0x200, scoped, tag = 'output window, operand 0, single buffered']
    %8 = vsyncpa [#allocation5], 0
    %9 = vsyncpa [#allocation4], 0
    // Predicated region
    $region2: #{_lambda_.1} parent=1 // pred_check
      _
    $region3: #{_lambda_.1} parent=1 // pred_check_branch
      %11 = sbr.rel (0) target = $region5
    $region4: #{_lambda_.1} parent=1 // pred_region
      %s13 = ssub.s32 16, 16
      %14 = vsyncadd [#allocation5], %s13
      %s16 = sshll.u32 %s0, 4
      %s17 = int_to_ptr.vmem [resolvable:$true] %s16
      %19 = dma.vmem_to_smem %s17, 16, [#allocation3], [#allocation5]
    $region5: #{_lambda_.1} parent=1 // pred_fallthru
      _
    // Predicated region
    $region6: #{_lambda_.1} parent=1 // pred_check
      _
    $region7: #{_lambda_.1} parent=1 // pred_check_branch
      %21 = sbr.rel (0) target = $region9
    $region8: #{_lambda_.1} parent=1 // pred_region
      _
    $region9: #{_lambda_.1} parent=1 // pred_fallthru
      _
    // Predicated region
    $region10: #{_lambda_.1} parent=1 // pred_check
      _
    $region11: #{_lambda_.1} parent=1 // pred_check_branch
      %23 = sbr.rel (0) target = $region13
    $region12: #{_lambda_.1} parent=1 // pred_region
      %24 = dma.done [#allocation5], 16
    $region13: #{_lambda_.1} parent=1 // pred_fallthru
      _
    %25 = sfence
    %s26 = sld [smem:[#allocation3]]
    %s27 = scalar_lea.smem [#allocation6], 0
    %28 = sst [smem:[%s27]] %s26
    %s29 = sld [smem:[#allocation3 + $0x1]]
    %s30 = scalar_lea.smem [#allocation6], 1
    %31 = sst [smem:[%s30]] %s29
    %s32 = sld [smem:[#allocation2]]
    %s33 = scalar_lea.smem [#allocation6], 2
    %34 = sst [smem:[%s33]] %s32
    // Predicated region
    $region14: #{_lambda_.1} parent=1 // pred_check
      _
    $region15: #{_lambda_.1} parent=1 // pred_check_branch
      %36 = sbr.rel (0) target = $region17
    $region16: #{_lambda_.1} parent=1 // pred_region
      %s38 = ssub.s32 16, 16
      %39 = vsyncadd [#allocation4], %s38
      %42 = dma.smem_to_hbm [#allocation6], 16, %s2, [#allocation4]
    $region17: #{_lambda_.1} parent=1 // pred_fallthru
      _
    // Predicated region
    $region18: #{_lambda_.1} parent=1 // pred_check
      _
    $region19: #{_lambda_.1} parent=1 // pred_check_branch
      %44 = sbr.rel (0) target = $region21
    $region20: #{_lambda_.1} parent=1 // pred_region
      %45 = dma.done [#allocation4], 16
    $region21: #{_lambda_.1} parent=1 // pred_fallthru
      _
    %46 = sfence
    %47 = vsyncpa [#allocation4], 1
    %48 = vsyncpa [#allocation5], 1

</llo_original>
